<compile_context>
chip_gen: v7x
topology: tpu7x:2x2x1
jax: 0.10.0
libtpu: 0.0.40
codegen_flags: <defaults>
</compile_context>

<pallas_src>
import functools

import jax
import jax.numpy as jnp
from jax import lax
from jax.experimental import pallas as pl
from jax.experimental.pallas import tpu as pltpu

CLAMP_MIN = 1e-12
CLAMP_MAX = 1.0e12


def _center_loss_kernel(x_ref, lbl_ref, centers_ref, o_ref, *,
                        batch_size, gather_dtype):
    # x_ref:       (TM, D) f32   -- tile of features
    # lbl_ref:     (TM, 1) i32   -- tile of labels
    # centers_ref: (C,  D) f32   -- full centers (single-buffered)
    # o_ref:       (1,  1) f32 in SMEM -- partial sum for this row tile
    x = x_ref[...]
    lbl = lbl_ref[...]
    centers = centers_ref[...]

    tm = x.shape[0]
    num_classes = centers.shape[0]

    # Gather each row's center with a one-hot matmul on the MXU. This avoids
    # materializing a (TM, C) f32 distmat + bool mask + where result, and is
    # numerically better than ||x||^2 + ||c||^2 - 2<x,c>.
    class_ids = lax.broadcasted_iota(jnp.int32, (tm, num_classes), 1)  # lane iota
    one_hot = (lbl == class_ids).astype(gather_dtype)                  # (TM, C)
    c_sel = jnp.dot(one_hot, centers.astype(gather_dtype),
                    preferred_element_type=jnp.float32)                # (TM, D)

    diff = x - c_sel
    selected = jnp.sum(diff * diff, axis=1, keepdims=True)             # (TM, 1)
    selected = jnp.minimum(jnp.maximum(selected, CLAMP_MIN), CLAMP_MAX)

    # Zero contributions from batch-padding rows, emit scalar partial to SMEM.
    row_ids = pl.program_id(0) * tm + lax.broadcasted_iota(jnp.int32, (tm, 1), 0)
    valid = row_ids < batch_size
    o_ref[0, 0] = jnp.sum(jnp.where(valid, selected, 0.0))


def _round_up(a, b):
    return (a + b - 1) // b * b


def _choose_tiling(batch, feat_dim, num_classes, block_rows):
    """Pick a row-tile size from a generation-aware VMEM budget."""
    try:
        vmem_cap = int(pltpu.get_tpu_info().vmem_capacity_bytes)
    except Exception:  # pragma: no cover - conservative fallback (v7x-sized)
        vmem_cap = 64 * 1024 * 1024
    budget = (vmem_cap * 3) // 4  # leave headroom under physical capacity

    d_pad = _round_up(feat_dim, 128)
    c_pad = _round_up(num_classes, 128)
    # Centers are grid-invariant and single-buffered (Buffered(1)).
    fixed_bytes = 4 * _round_up(num_classes, 8) * d_pad
    # Per row: x (double-buffered) + (TM, C)-ish one-hot/compare temporaries
    # + label column (double-buffered, padded to a full lane group).
    per_row_bytes = 4 * (2 * d_pad + 2 * c_pad) + 2 * 128 * 4

    tm_budget = max(8, (budget - fixed_bytes) // per_row_bytes // 8 * 8)
    tm_cap = max(8, min(block_rows, tm_budget) // 8 * 8)

    if batch <= 8:
        tm = 8
    else:
        # At least 2 row tiles so the "parallel" axis can shard across cores.
        n_tiles = max(2, -(-batch // tm_cap))
        tm = _round_up(-(-batch // n_tiles), 8)

    padded = _round_up(batch, tm)
    num_tiles = padded // tm

    est_bytes = fixed_bytes + per_row_bytes * tm
    vmem_limit = int(min(budget, max(32 * 1024 * 1024, est_bytes + (8 << 20))))
    return tm, num_tiles, padded, vmem_limit


def center_loss(x, labels, centers, *, block_rows=1024,
                gather_dtype=jnp.float32):
    """x: (B, D) f32, labels: (B,) int, centers: (C, D) f32 -> scalar f32 loss.

    gather_dtype=jnp.bfloat16 halves MXU cost of the one-hot gather on
    v6e/v7x at a small accuracy cost (centers rounded to bf16); default f32.
    """
    batch, feat_dim = x.shape
    num_classes = centers.shape[0]

    x = x.astype(jnp.float32)
    centers = centers.astype(jnp.float32)
    labels = labels.astype(jnp.int32)

    tm, num_tiles, padded, vmem_limit = _choose_tiling(
        batch, feat_dim, num_classes, block_rows)

    if padded != batch:
        x = jnp.pad(x, ((0, padded - batch), (0, 0)))
        labels = jnp.pad(labels, (0, padded - batch))  # padded rows masked in-kernel
    lbl_col = labels.reshape(padded, 1)

    kernel = functools.partial(_center_loss_kernel, batch_size=batch,
                               gather_dtype=gather_dtype)

    cost = pl.CostEstimate(
        flops=2 * padded * num_classes * feat_dim + 4 * padded * feat_dim,
        transcendentals=0,
        bytes_accessed=4 * (padded * feat_dim + num_classes * feat_dim
                            + padded + num_tiles))

    partials = pl.pallas_call(
        kernel,
        out_shape=jax.ShapeDtypeStruct((num_tiles, 1), jnp.float32),
        grid=(num_tiles,),
        in_specs=[
            pl.BlockSpec((tm, feat_dim), lambda i: (i, 0)),
            pl.BlockSpec((tm, 1), lambda i: (i, 0)),
            pl.BlockSpec((num_classes, feat_dim), lambda i: (0, 0),
                         pipeline_mode=pl.Buffered(1)),
        ],
        out_specs=pl.BlockSpec((1, 1), lambda i: (i, 0),
                               memory_space=pltpu.MemorySpace.SMEM),
        compiler_params=pltpu.CompilerParams(
            dimension_semantics=("parallel",),
            vmem_limit_bytes=vmem_limit),
        cost_estimate=cost,
    )(x, lbl_col, centers)

    return jnp.sum(partials) / jnp.float32(batch)


def _reference_center_loss(x, labels, centers):
    # Pure-JAX mirror of the PyTorch forward (expanded-distance form;
    # vectorized mask-select instead of the python per-row loop — identical
    # values since exactly one class matches per row).
    num_classes = centers.shape[0]
    distmat = (jnp.sum(x * x, axis=1, keepdims=True)
               + jnp.sum(centers * centers, axis=1)[None, :]
               - 2.0 * (x @ centers.T))
    mask = labels[:, None] == jnp.arange(num_classes)[None, :]
    dist = jnp.sum(jnp.where(mask, distmat, 0.0), axis=1)
    dist = jnp.minimum(jnp.maximum(dist, CLAMP_MIN), CLAMP_MAX)
    return jnp.mean(dist)


if __name__ == "__main__":
    key = jax.random.PRNGKey(0)
    batch, feat_dim, num_classes = 8, 32, 10
    kx, kc = jax.random.split(key)

    x = jax.random.normal(kx, (batch, feat_dim), dtype=jnp.float32)
    centers = jax.random.normal(kc, (num_classes, feat_dim), dtype=jnp.float32)
    labels = jnp.array([0, 1, 2, 3, 4, 0, 1, 2], dtype=jnp.int32)

    loss = jax.block_until_ready(center_loss(x, labels, centers))
    ref = jax.block_until_ready(_reference_center_loss(x, labels, centers))

    assert jnp.allclose(loss, ref, rtol=1e-4, atol=1e-5), (loss, ref)
    print("KERNEL_OK")
</pallas_src>

<mosaic_0001>
module attributes {stable_mosaic.version = 11 : i64} {
  func.func @_center_loss_kernel(%arg0: i32, %arg1: memref<8x32xf32, #tpu.memory_space<vmem>>, %arg2: memref<8x1xi32, #tpu.memory_space<vmem>>, %arg3: memref<10x32xf32, #tpu.memory_space<vmem>>, %arg4: memref<1x1xf32, #tpu.memory_space<smem>>) attributes {dimension_semantics = [#tpu.dimension_semantics<parallel>], iteration_bounds = array<i64: 1>, scalar_prefetch = 0 : i64, scratch_operands = 0 : i64, tpu.core_type = #tpu.core_type<tc>, window_params = [{transform_indices = @transform_0, window_bounds = array<i64: 8, 32>}, {transform_indices = @transform_1, window_bounds = array<i64: 8, 1>}, {pipeline_mode = #tpu.pipeline_mode<synchronous>, transform_indices = @transform_2, window_bounds = array<i64: 10, 32>}, {transform_indices = @transform_3, window_bounds = array<i64: 1, 1>}]} {
    %c0 = arith.constant 0 : index
    %c0_0 = arith.constant 0 : index
    %0 = vector.load %arg1[%c0, %c0_0] : memref<8x32xf32, #tpu.memory_space<vmem>>, vector<8x32xf32>
    %c0_1 = arith.constant 0 : index
    %c0_2 = arith.constant 0 : index
    %1 = vector.load %arg2[%c0_1, %c0_2] : memref<8x1xi32, #tpu.memory_space<vmem>>, vector<8x1xi32>
    %c0_3 = arith.constant 0 : index
    %c0_4 = arith.constant 0 : index
    %2 = vector.load %arg3[%c0_3, %c0_4] : memref<10x32xf32, #tpu.memory_space<vmem>>, vector<10x32xf32>
    %3 = tpu.iota {dimensions = array<i32: 1>} : vector<8x10xi32>
    %4 = vector.broadcast %1 : vector<8x1xi32> to vector<8x10xi32>
    %5 = arith.cmpi eq, %4, %3 : vector<8x10xi32>
    %6 = arith.extui %5 : vector<8x10xi1> to vector<8x10xi32>
    %7 = arith.sitofp %6 : vector<8x10xi32> to vector<8x10xf32>
    %cst = arith.constant dense<0.000000e+00> : vector<8x32xf32>
    %8 = tpu.matmul %7, %2, %cst {dimension_numbers = #tpu.dot_dimension_numbers<[1], [0], [0], [1], [0, 0, 1, 1], [], []>} : vector<8x10xf32>, vector<10x32xf32>, vector<8x32xf32> -> vector<8x32xf32>
    %9 = arith.subf %0, %8 : vector<8x32xf32>
    %10 = arith.mulf %9, %9 : vector<8x32xf32>
    %cst_5 = arith.constant dense<0.000000e+00> : vector<8xf32>
    %11 = vector.multi_reduction <add>, %10, %cst_5 [1] : vector<8x32xf32> to vector<8xf32>
    %12 = vector.shape_cast %11 : vector<8xf32> to vector<8x1xf32>
    %cst_6 = arith.constant 9.99999996E-13 : f32
    %13 = vector.broadcast %cst_6 : f32 to vector<8x1xf32>
    %14 = arith.maximumf %12, %13 : vector<8x1xf32>
    %cst_7 = arith.constant 9.99999995E+11 : f32
    %15 = vector.broadcast %cst_7 : f32 to vector<8x1xf32>
    %16 = arith.minimumf %14, %15 : vector<8x1xf32>
    %c8_i32 = arith.constant 8 : i32
    %17 = arith.muli %arg0, %c8_i32 : i32
    %18 = tpu.iota {dimensions = array<i32: 0>} : vector<8x1xi32>
    %19 = vector.broadcast %17 : i32 to vector<8x1xi32>
    %20 = arith.addi %19, %18 : vector<8x1xi32>
    %c8_i32_8 = arith.constant 8 : i32
    %21 = vector.broadcast %c8_i32_8 : i32 to vector<8x1xi32>
    %22 = arith.cmpi slt, %20, %21 : vector<8x1xi32>
    %cst_9 = arith.constant 0.000000e+00 : f32
    %23 = vector.broadcast %cst_9 : f32 to vector<8x1xf32>
    %24 = arith.select %22, %16, %23 : vector<8x1xi1>, vector<8x1xf32>
    %25 = vector.shape_cast %24 : vector<8x1xf32> to vector<1x8x1xf32>
    %cst_10 = arith.constant dense<0.000000e+00> : vector<1xf32>
    %26 = vector.multi_reduction <add>, %25, %cst_10 [1, 2] : vector<1x8x1xf32> to vector<1xf32>
    %27 = vector.shape_cast %26 : vector<1xf32> to vector<1x1x1xf32>
    %28 = vector.extract %27[0, 0, 0] : f32 from vector<1x1x1xf32>
    %c0_11 = arith.constant 0 : index
    %c0_12 = arith.constant 0 : index
    %29 = memref.load %arg4[%c0_11, %c0_12] : memref<1x1xf32, #tpu.memory_space<smem>>
    memref.store %28, %arg4[%c0_11, %c0_12] : memref<1x1xf32, #tpu.memory_space<smem>>
    return
  }
  func.func @transform_0(%arg0: i32) -> (i32, i32) {
    %c0_i32 = arith.constant 0 : i32
    %c0_i32_0 = arith.constant 0 : i32
    return %arg0, %c0_i32 : i32, i32
  }
  func.func @transform_1(%arg0: i32) -> (i32, i32) {
    %c0_i32 = arith.constant 0 : i32
    %c0_i32_0 = arith.constant 0 : i32
    return %arg0, %c0_i32 : i32, i32
  }
  func.func @transform_2(%arg0: i32) -> (i32, i32) {
    %c0_i32 = arith.constant 0 : i32
    %c0_i32_0 = arith.constant 0 : i32
    %c0_i32_1 = arith.constant 0 : i32
    return %c0_i32, %c0_i32_0 : i32, i32
  }
  func.func @transform_3(%arg0: i32) -> (i32, i32) {
    %c0_i32 = arith.constant 0 : i32
    %c0_i32_0 = arith.constant 0 : i32
    return %arg0, %c0_i32 : i32, i32
  }
}

</mosaic_0001>

<llo_original>
// kernel: tpu_custom_call.1
$region0: #{tpu_custom_call.1}
  #allocation0 [shape = 'u32[]', space=smem, size = 0x4, offset = 0x4, fixed_abs, tag = 'smem constant byte address 0x4 - core index']
  #allocation1 [shape = 'u32[144,128]{1,0:T(1,128)}', space=vmem, size = 0x12000, scoped, tag = 'internal scratch']
  %s0 = inlined_call_operand.hbm [shape: f32[8,32], index: 0, kind: input, shape index: {}]
  %s1 = inlined_call_operand.vmem [shape: s32[8,1], index: 1, kind: input, shape index: {}]
  %s2 = inlined_call_operand.vmem [shape: f32[10,32], index: 2, kind: input, shape index: {}]
  %s3 = inlined_call_operand.hbm [shape: f32[1,1], index: 3, kind: output, shape index: {}]
  %s4 = sld [smem:[#allocation0]]
  $region26: #{tpu_custom_call.1} parent=0
    _
  %s6 = ssub.s32 1, %s4
  %s7 = scalar_select 0, %s6, %s4
  $region1: #{tpu_custom_call.1} parent=0
    #allocation2 [shape = 'u8[4096]{0}', space=vmem, size = 0x1000, scoped, tag = 'input window, operand 0, single buffered']
    #allocation3 [shape = 's32[1]{0}', space=sflag, size = 0x4, scoped, tag = 'scoped memory for tpu_custom_call.1']
    #allocation4 [shape = 's32[1]{0}', space=sflag, size = 0x4, scoped, tag = 'scoped memory for tpu_custom_call.1']
    #allocation5 [shape = 'u8[512]{0}', space=smem, size = 0x200, scoped, tag = 'output window, operand 0, single buffered']
    %8 = vsyncpa [#allocation3], 0
    %9 = vsyncpa [#allocation4], 0
    // Predicated region
    $region2: #{tpu_custom_call.1} parent=1 // pred_check
      _
    $region3: #{tpu_custom_call.1} parent=1 // pred_check_branch
      %11 = sbr.rel (0) target = $region5
    $region4: #{tpu_custom_call.1} parent=1 // pred_region
      %s13 = ssub.s32 128, 128
      %14 = vsyncadd [#allocation3], %s13
      %s16 = sshll.u32 [#allocation2], 4
      %s17 = int_to_ptr.vmem [resolvable:$true] %s16
      %19 = dma.hbm_to_vmem [thread:$0]  %s0, 128, %s17, [#allocation3]
    $region5: #{tpu_custom_call.1} parent=1 // pred_fallthru
      _
    // Predicated region
    $region6: #{tpu_custom_call.1} parent=1 // pred_check
      _
    $region7: #{tpu_custom_call.1} parent=1 // pred_check_branch
      %21 = sbr.rel (0) target = $region9
    $region8: #{tpu_custom_call.1} parent=1 // pred_region
      _
    $region9: #{tpu_custom_call.1} parent=1 // pred_fallthru
      _
    // Predicated region
    $region10: #{tpu_custom_call.1} parent=1 // pred_check
      _
    $region11: #{tpu_custom_call.1} parent=1 // pred_check_branch
      %23 = sbr.rel (0) target = $region13
    $region12: #{tpu_custom_call.1} parent=1 // pred_region
      _
    $region13: #{tpu_custom_call.1} parent=1 // pred_fallthru
      _
    // Predicated region
    $region14: #{tpu_custom_call.1} parent=1 // pred_check
      _
    $region15: #{tpu_custom_call.1} parent=1 // pred_check_branch
      %25 = sbr.rel (0) target = $region17
    $region16: #{tpu_custom_call.1} parent=1 // pred_region
      %26 = dma.done [#allocation3], 128
    $region17: #{tpu_custom_call.1} parent=1 // pred_fallthru
      _
    %v27 = vld [vmem:[#allocation2] sm:$0xff]
    %v28 = vld [vmem:[%s1] sm:$0xff]
    %v29 = vld [vmem:[%s2] sm:$0xff]
    %v30 = vld [vmem:[%s2 + $0x8] sm:$0x3]
    %v31 = vlaneseq
    %v32 = vand.u32 %v31, 127
    %33 = vset.pattern.permute.xlu0 0
    %34 = vperm.xlu0 %33, %v28
    %v35 = vpop.permute.xlu0 %34
    %vm36 = vcmp.eq.s32.totalorder %v35, %v32
    %v37 = vsel %vm36, 1, 0
    %v38 = vcvt.s32.f32 %v37
    %vm39 = vcmask 80896
    %v41 = vsel %vm39, %v38, 0
    %vm43 = vcmask 1041408
    %v45 = vsel %vm43, %v30, 0
    %47 = vmatprep.subr.mxu0 0.0
    %48 = vmatpush1.msra.mxu0 %v29
    %49 = vmatprep.subr.mxu0 0.0
    %50 = vmatpush1.msra.mxu0 %v45
    %51 = vmatprep.subr.mxu0 0.0
    %52 = vmatpush1.msra.mxu0 0.0
    %53 = vmatprep.subr.mxu0 0.0
    %54 = vmatpush1.msra.mxu0 0.0
    %55 = vmatprep.subr.mxu0 0.0
    %56 = vmatpush1.msra.mxu0 0.0
    %57 = vmatprep.subr.mxu0 0.0
    %58 = vmatpush1.msra.mxu0 0.0
    %59 = vmatprep.subr.mxu0 0.0
    %60 = vmatpush1.msra.mxu0 0.0
    %61 = vmatprep.subr.mxu0 0.0
    %62 = vmatpush1.msra.mxu0 0.0
    %63 = vmatprep.subr.mxu0 0.0
    %64 = vmatpush1.msra.mxu0 0.0
    %65 = vmatprep.subr.mxu0 0.0
    %66 = vmatpush1.msra.mxu0 0.0
    %67 = vmatprep.subr.mxu0 0.0
    %68 = vmatpush1.msra.mxu0 0.0
    %69 = vmatprep.subr.mxu0 0.0
    %70 = vmatpush1.msra.mxu0 0.0
    %71 = vmatprep.subr.mxu0 0.0
    %72 = vmatpush1.msra.mxu0 0.0
    %73 = vmatprep.subr.mxu0 0.0
    %74 = vmatpush1.msra.mxu0 0.0
    %75 = vmatprep.subr.mxu0 0.0
    %76 = vmatpush1.msra.mxu0 0.0
    %77 = vmatprep.subr.mxu0 0.0
    %78 = vmatpush1.msra.mxu0 0.0
    %79 = vmatprep.subr.mxu0 0.0
    %80 = vmatpush1.msra.mxu0 0.0
    %81 = vmatprep.subr.mxu0 0.0
    %82 = vmatpush1.msra.mxu0 0.0
    %83 = vmatprep.subr.mxu0 0.0
    %84 = vmatpush1.msra.mxu0 0.0
    %85 = vmatprep.subr.mxu0 0.0
    %86 = vmatpush1.msra.mxu0 0.0
    %87 = vmatprep.subr.mxu0 0.0
    %88 = vmatpush1.msra.mxu0 0.0
    %89 = vmatprep.subr.mxu0 0.0
    %90 = vmatpush1.msra.mxu0 0.0
    %91 = vmatprep.subr.mxu0 0.0
    %92 = vmatpush1.msra.mxu0 0.0
    %93 = vmatprep.subr.mxu0 0.0
    %94 = vmatpush1.msra.mxu0 0.0
    %95 = vmatprep.subr.mxu0 0.0
    %96 = vmatpush1.msra.mxu0 0.0
    %97 = vmatprep.subr.mxu0 0.0
    %98 = vmatpush1.msra.mxu0 0.0
    %99 = vmatprep.subr.mxu0 0.0
    %100 = vmatpush1.msra.mxu0 0.0
    %101 = vmatprep.subr.mxu0 0.0
    %102 = vmatpush1.msra.mxu0 0.0
    %103 = vmatprep.subr.mxu0 0.0
    %104 = vmatpush1.msra.mxu0 0.0
    %105 = vmatprep.subr.mxu0 0.0
    %106 = vmatpush1.msra.mxu0 0.0
    %107 = vmatprep.subr.mxu0 0.0
    %108 = vmatpush1.msra.mxu0 0.0
    %109 = vmatprep.subr.mxu0 0.0
    %110 = vmatpush1.msra.mxu0 0.0
    %111 = vmatprep.mubr.f32.mxu0 0.0
    %112 = vmatmul.mubr.f32.gmra.mrb[0].mxu0 %v41
    %v113 = vpop.f32.mrb[0].mxu0
    %v114 = vadd.f32 0.0, %v113
    %v115 = vpop.f32.mrb[0].mxu0
    %116 = vdwg.mxu0
    %v117 = vsub.f32 %v27, %v114
    %v118 = vmul.f32 %v117, %v117
    %vm119 = vcmask 261120
    %v120 = vsel %vm119, %v118, 0.0
    %121 = vadd.xlane.f32.xlu0 %v120
    %v122 = vpop.xlane.xlu0 %121
    %v123 = vmax.f32 %v122, 1e-12
    %v124 = vmin.f32 %v123, 1e+12
    %s125 = smul.u32 0, 8
    %v126 = vlaneseq
    %v127 = vshrl.u32 %v126, 7
    %v128 = vstv %s125
    %v129 = vadd.s32 %v128, %v127
    %vm130 = vcmp.lt.s32.totalorder %v129, 8
    %v131 = vsel %vm130, %v124, 0.0
    %vm132 = vcmask 7168
    %v133 = vsel %vm132, %v131, 0.0
    %134 = vadd.xlane.f32.xlu0 %v133
    %v135 = vpop.xlane.xlu0 %134
    %v136 = vrot.slane %v135, 4
    %v137 = vadd.f32 %v135, %v136
    %v138 = vrot.slane %v137, 2
    %v139 = vadd.f32 %v137, %v138
    %v140 = vrot.slane %v139, 1
    %v141 = vadd.f32 %v139, %v140
    %s142 = vtos %v141
    %s143 = scalar_lea.smem [#allocation5], 0
    %144 = sst [smem:[%s143]] %s142
    // Predicated region
    $region18: #{tpu_custom_call.1} parent=1 // pred_check
      _
    $region19: #{tpu_custom_call.1} parent=1 // pred_check_branch
      %146 = sbr.rel (0) target = $region21
    $region20: #{tpu_custom_call.1} parent=1 // pred_region
      %s148 = ssub.s32 16, 16
      %149 = vsyncadd [#allocation4], %s148
      %152 = dma.smem_to_hbm [#allocation5], 16, %s3, [#allocation4]
    $region21: #{tpu_custom_call.1} parent=1 // pred_fallthru
      _
    // Predicated region
    $region22: #{tpu_custom_call.1} parent=1 // pred_check
      _
    $region23: #{tpu_custom_call.1} parent=1 // pred_check_branch
      %154 = sbr.rel (0) target = $region25
    $region24: #{tpu_custom_call.1} parent=1 // pred_region
      %155 = dma.done [#allocation4], 16
    $region25: #{tpu_custom_call.1} parent=1 // pred_fallthru
      _
    %156 = sfence
    %157 = vsyncpa [#allocation3], 1
    %158 = vsyncpa [#allocation4], 1

</llo_original>
